<compile_context>
chip_gen: v6e
topology: v6e:2x2x1
jax: 0.10.0
libtpu: 0.0.40
codegen_flags: <defaults>
</compile_context>

<pallas_src>
import jax
import jax.numpy as jnp
from jax import lax
from jax.experimental import pallas as pl
from jax.experimental.pallas import tpu as pltpu

# ----------------------------- small synthetic config -----------------------------
BATCH = 8            # per-view batch size (small)
INPUT_DIM = 256      # encoder input features (config.input_dim, shrunk)
EMBED_DIM = 128      # config.embedding_dim == projector hidden dim (shrunk)
PROJ_DIM = 128       # config.projection_dim (shrunk; multiple of 128 for
                     # unmasked lane-dense output stores)

LN_EPS = 1e-5        # nn.LayerNorm default
BN_EPS = 1e-5        # nn.BatchNorm1d default
L2_EPS = 1e-12       # F.normalize default

# rows of the packed (8,128) f32 bias/affine array
_ROW_BE, _ROW_B1, _ROW_BNG, _ROW_BNB, _ROW_B2 = 0, 1, 2, 3, 4
_VEC_ROWS = 8        # padded to a full (8,128) sublane tile


# ----------------------------------- kernel ---------------------------------------
def _make_kernel(nviews, rows_per_view):
    """Kernel factory; nviews / rows_per_view are static (baked into the trace)."""

    def kernel(x_ref, we_ref, w1_ref, w2_ref, vec_ref, out_ref):
        # x_ref: (nviews*rows_per_view, INPUT_DIM) bf16 -- both views merged on M.
        vec = vec_ref[...]                              # (8,128) f32 packed rows
        be   = vec[_ROW_BE:_ROW_BE + 1, :]
        b1   = vec[_ROW_B1:_ROW_B1 + 1, :]
        bn_g = vec[_ROW_BNG:_ROW_BNG + 1, :]
        bn_b = vec[_ROW_BNB:_ROW_BNB + 1, :]
        b2   = vec[_ROW_B2:_ROW_B2 + 1, :]

        # ---- encoder (simple linear stand-in; reference encoder is an injected module)
        # TODO(synk): reference code injects an arbitrary `encoder` nn.Module; a linear
        # encoder is used here as a deterministic synthetic stand-in.
        z = jnp.dot(x_ref[...], we_ref[...],
                    preferred_element_type=jnp.float32) + be

        # ---- ProjectionHead: LayerNorm stats (affine folded into W1/b1 on host).
        mu = jnp.mean(z, axis=-1, keepdims=True)
        var = jnp.maximum(jnp.mean(z * z, axis=-1, keepdims=True) - mu * mu, 0.0)
        zn = (z - mu) * lax.rsqrt(var + LN_EPS)

        # ---- Linear(embedding_dim -> embedding_dim)   (ln_g/ln_b pre-folded)
        h = jnp.dot(zn.astype(jnp.bfloat16), w1_ref[...],
                    preferred_element_type=jnp.float32) + b1

        # ---- BatchNorm1d: training-mode batch statistics, PER VIEW (biased variance)
        # TODO(synk): running_mean / running_var buffers are not tracked (train-mode
        # batch stats only), matching PyTorch forward math but not its buffer updates.
        hv = h.reshape(nviews, rows_per_view, EMBED_DIM)
        bm = jnp.mean(hv, axis=1, keepdims=True)
        bv = jnp.maximum(jnp.mean(hv * hv, axis=1, keepdims=True) - bm * bm, 0.0)
        hn = (hv - bm) * lax.rsqrt(bv + BN_EPS) * bn_g + bn_b
        hn = hn.reshape(nviews * rows_per_view, EMBED_DIM)

        # ---- ReLU
        hr = jnp.maximum(hn, 0.0)

        # ---- Linear(embedding_dim -> projection_dim)
        p = jnp.dot(hr.astype(jnp.bfloat16), w2_ref[...],
                    preferred_element_type=jnp.float32) + b2

        # ---- F.normalize(dim=1): row-wise L2 normalize via EUP rsqrt
        ss = jnp.sum(p * p, axis=-1, keepdims=True)
        out_ref[...] = p * lax.rsqrt(jnp.maximum(ss, L2_EPS * L2_EPS))

    return kernel


# ---------------------------------- wrapper ----------------------------------------
def _simclr_fused(x_merged, params, nviews):
    """x_merged: (nviews*B, INPUT_DIM) bf16 -> (nviews*B, PROJ_DIM) f32. One step."""
    m = x_merged.shape[0]
    rows = m // nviews
    vmem = pl.BlockSpec(memory_space=pltpu.MemorySpace.VMEM)   # whole array in VMEM
    return pl.pallas_call(
        _make_kernel(nviews, rows),
        out_shape=jax.ShapeDtypeStruct((m, PROJ_DIM), jnp.float32),
        in_specs=[vmem] * 5,
        out_specs=vmem,
    )(x_merged, params["we"], params["w1"], params["w2"], params["vecs"])


@jax.jit
def simclr_forward_pair(x1, x2, params):
    """Both views merged along M in ONE kernel call; weights DMA'd once."""
    b = x1.shape[0]
    xm = jnp.concatenate([x1, x2], axis=0).astype(jnp.bfloat16)
    out = _simclr_fused(xm, params, nviews=2)
    return out[:b], out[b:]


@jax.jit
def simclr_forward_single(x1, params):
    return _simclr_fused(x1.astype(jnp.bfloat16), params, nviews=1)


def simclr_forward(x1, params, x2=None):
    """Matches SimCLRModel.forward: returns (h1, h2) or (h1, None)."""
    if x2 is not None:
        return simclr_forward_pair(x1, x2, params)
    return simclr_forward_single(x1, params), None


# ------------------------------ deterministic init ---------------------------------
def init_params(key):
    ks = jax.random.split(key, 3)

    def lin(k, fan_in, fan_out):
        # Kaiming-uniform-ish deterministic init, stored as (in, out), f32.
        bound = 1.0 / jnp.sqrt(fan_in)
        kw, kb = jax.random.split(k)
        w = jax.random.uniform(kw, (fan_in, fan_out), jnp.float32, -bound, bound)
        b = jax.random.uniform(kb, (fan_out,), jnp.float32, -bound, bound)
        return w, b

    we, be = lin(ks[0], INPUT_DIM, EMBED_DIM)      # encoder linear stand-in
    w1, b1 = lin(ks[1], EMBED_DIM, EMBED_DIM)      # projector linear 1
    w2, b2 = lin(ks[2], EMBED_DIM, PROJ_DIM)       # projector linear 2

    ln_g = jnp.ones((EMBED_DIM,), jnp.float32)     # nn.LayerNorm affine defaults
    ln_b = jnp.zeros((EMBED_DIM,), jnp.float32)
    bn_g = jnp.ones((EMBED_DIM,), jnp.float32)     # nn.BatchNorm1d affine defaults
    bn_b = jnp.zeros((EMBED_DIM,), jnp.float32)

    # Host-side fold of the LayerNorm affine into Linear-1 (done in f32, then cast):
    #   W1' = diag(ln_g) @ W1 ,  b1' = ln_b @ W1 + b1
    w1_f = w1 * ln_g[:, None]
    b1_f = ln_b @ w1 + b1

    # Pack the five remaining (128,) f32 vectors into one (8,128) array (3 pad rows).
    vecs = jnp.zeros((_VEC_ROWS, EMBED_DIM), jnp.float32)
    vecs = vecs.at[_ROW_BE].set(be)
    vecs = vecs.at[_ROW_B1].set(b1_f)
    vecs = vecs.at[_ROW_BNG].set(bn_g)
    vecs = vecs.at[_ROW_BNB].set(bn_b)
    vecs = vecs.at[_ROW_B2].set(b2)

    return {
        "we": we.astype(jnp.bfloat16),     # bf16 MXU operands, halved weight traffic
        "w1": w1_f.astype(jnp.bfloat16),
        "w2": w2.astype(jnp.bfloat16),
        "vecs": vecs,                      # f32 biases / BN affine stay full precision
    }


# --------------------------- plain-JAX reference (same weights) ---------------------
def _reference(x, params, nviews):
    """Pure-JAX forward using the SAME bf16 weights; used to sanity-check the kernel."""
    vecs = params["vecs"]
    be, b1, bn_g, bn_b, b2 = (vecs[i] for i in range(5))
    x = x.astype(jnp.bfloat16)
    z = jnp.dot(x, params["we"], preferred_element_type=jnp.float32) + be
    mu = jnp.mean(z, -1, keepdims=True)
    var = jnp.maximum(jnp.mean(z * z, -1, keepdims=True) - mu * mu, 0.0)
    zn = (z - mu) * lax.rsqrt(var + LN_EPS)
    h = jnp.dot(zn.astype(jnp.bfloat16), params["w1"],
                preferred_element_type=jnp.float32) + b1
    hv = h.reshape(nviews, -1, EMBED_DIM)
    bm = jnp.mean(hv, 1, keepdims=True)
    bv = jnp.maximum(jnp.mean(hv * hv, 1, keepdims=True) - bm * bm, 0.0)
    hn = ((hv - bm) * lax.rsqrt(bv + BN_EPS) * bn_g + bn_b).reshape(h.shape)
    hr = jnp.maximum(hn, 0.0)
    p = jnp.dot(hr.astype(jnp.bfloat16), params["w2"],
                preferred_element_type=jnp.float32) + b2
    nrm = jnp.maximum(jnp.linalg.norm(p, axis=1, keepdims=True), L2_EPS)
    return p / nrm


# -------------------------------------- main ---------------------------------------
if __name__ == "__main__":
    key = jax.random.PRNGKey(0)
    k_p, k_x1, k_x2 = jax.random.split(key, 3)
    params = init_params(k_p)

    x1 = jax.random.normal(k_x1, (BATCH, INPUT_DIM), jnp.float32)
    x2 = jax.random.normal(k_x2, (BATCH, INPUT_DIM), jnp.float32)

    # two-view path: one fused kernel launch, views merged along M
    h1, h2 = simclr_forward(x1, params, x2)
    jax.block_until_ready((h1, h2))

    # one-view path (h2 is None)
    h1_only, none_out = simclr_forward(x1, params)
    jax.block_until_ready(h1_only)

    # sanity: shapes, unit-norm rows
    assert h1.shape == (BATCH, PROJ_DIM) and h2.shape == (BATCH, PROJ_DIM)
    assert none_out is None
    assert bool(jnp.all(jnp.abs(jnp.linalg.norm(h1, axis=1) - 1.0) < 1e-3))
    assert bool(jnp.all(jnp.abs(jnp.linalg.norm(h2, axis=1) - 1.0) < 1e-3))

    # merged-view kernel matches the single-view kernel for view 1
    # (BatchNorm stats are per-view, so semantics are unchanged by the merge)
    assert bool(jnp.all(jnp.abs(h1 - h1_only) < 1e-4))

    # kernel agrees with a plain-JAX reference using the same bf16 weights
    ref = _reference(jnp.concatenate([x1, x2], axis=0), params, nviews=2)
    assert bool(jnp.all(jnp.abs(jnp.concatenate([h1, h2], axis=0) - ref) < 1e-2))

    print("KERNEL_OK")
</pallas_src>

<mosaic_0001>
module attributes {stable_mosaic.version = 11 : i64} {
  func.func @kernel(%arg0: memref<16x256xbf16, #tpu.memory_space<vmem>>, %arg1: memref<256x128xbf16, #tpu.memory_space<vmem>>, %arg2: memref<128x128xbf16, #tpu.memory_space<vmem>>, %arg3: memref<128x128xbf16, #tpu.memory_space<vmem>>, %arg4: memref<8x128xf32, #tpu.memory_space<vmem>>, %arg5: memref<16x128xf32, #tpu.memory_space<vmem>>) attributes {dimension_semantics = [], scalar_prefetch = 0 : i64, scratch_operands = 0 : i64, tpu.core_type = #tpu.core_type<tc>} {
    %c0 = arith.constant 0 : index
    %c0_0 = arith.constant 0 : index
    %0 = vector.load %arg4[%c0, %c0_0] : memref<8x128xf32, #tpu.memory_space<vmem>>, vector<8x128xf32>
    %1 = vector.extract_strided_slice %0 {offsets = [0, 0], sizes = [1, 128], strides = [1, 1]} : vector<8x128xf32> to vector<1x128xf32>
    %2 = vector.extract_strided_slice %0 {offsets = [1, 0], sizes = [1, 128], strides = [1, 1]} : vector<8x128xf32> to vector<1x128xf32>
    %3 = vector.extract_strided_slice %0 {offsets = [2, 0], sizes = [1, 128], strides = [1, 1]} : vector<8x128xf32> to vector<1x128xf32>
    %4 = vector.extract_strided_slice %0 {offsets = [3, 0], sizes = [1, 128], strides = [1, 1]} : vector<8x128xf32> to vector<1x128xf32>
    %5 = vector.extract_strided_slice %0 {offsets = [4, 0], sizes = [1, 128], strides = [1, 1]} : vector<8x128xf32> to vector<1x128xf32>
    %c0_1 = arith.constant 0 : index
    %c0_2 = arith.constant 0 : index
    %6 = vector.load %arg0[%c0_1, %c0_2] : memref<16x256xbf16, #tpu.memory_space<vmem>>, vector<16x256xbf16>
    %c0_3 = arith.constant 0 : index
    %c0_4 = arith.constant 0 : index
    %7 = vector.load %arg1[%c0_3, %c0_4] : memref<256x128xbf16, #tpu.memory_space<vmem>>, vector<256x128xbf16>
    %cst = arith.constant dense<0.000000e+00> : vector<16x128xf32>
    %8 = tpu.matmul %6, %7, %cst {dimension_numbers = #tpu.dot_dimension_numbers<[1], [0], [0], [1], [0, 0, 1, 1], [], []>} : vector<16x256xbf16>, vector<256x128xbf16>, vector<16x128xf32> -> vector<16x128xf32>
    %9 = vector.broadcast %1 : vector<1x128xf32> to vector<16x128xf32>
    %10 = arith.addf %8, %9 : vector<16x128xf32>
    %cst_5 = arith.constant dense<0.000000e+00> : vector<16xf32>
    %11 = vector.multi_reduction <add>, %10, %cst_5 [1] : vector<16x128xf32> to vector<16xf32>
    %12 = vector.shape_cast %11 : vector<16xf32> to vector<16x1xf32>
    %cst_6 = arith.constant 1.280000e+02 : f32
    %13 = vector.broadcast %cst_6 : f32 to vector<16x1xf32>
    %14 = arith.divf %12, %13 : vector<16x1xf32>
    %15 = arith.mulf %10, %10 : vector<16x128xf32>
    %cst_7 = arith.constant dense<0.000000e+00> : vector<16xf32>
    %16 = vector.multi_reduction <add>, %15, %cst_7 [1] : vector<16x128xf32> to vector<16xf32>
    %17 = vector.shape_cast %16 : vector<16xf32> to vector<16x1xf32>
    %cst_8 = arith.constant 1.280000e+02 : f32
    %18 = vector.broadcast %cst_8 : f32 to vector<16x1xf32>
    %19 = arith.divf %17, %18 : vector<16x1xf32>
    %20 = arith.mulf %14, %14 : vector<16x1xf32>
    %21 = arith.subf %19, %20 : vector<16x1xf32>
    %cst_9 = arith.constant 0.000000e+00 : f32
    %22 = vector.broadcast %cst_9 : f32 to vector<16x1xf32>
    %23 = arith.maximumf %21, %22 : vector<16x1xf32>
    %24 = vector.broadcast %14 : vector<16x1xf32> to vector<16x128xf32>
    %25 = arith.subf %10, %24 : vector<16x128xf32>
    %cst_10 = arith.constant 9.99999974E-6 : f32
    %26 = vector.broadcast %cst_10 : f32 to vector<16x1xf32>
    %27 = arith.addf %23, %26 : vector<16x1xf32>
    %28 = math.rsqrt %27 : vector<16x1xf32>
    %29 = vector.broadcast %28 : vector<16x1xf32> to vector<16x128xf32>
    %30 = arith.mulf %25, %29 : vector<16x128xf32>
    %31 = arith.truncf %30 : vector<16x128xf32> to vector<16x128xbf16>
    %c0_11 = arith.constant 0 : index
    %c0_12 = arith.constant 0 : index
    %32 = vector.load %arg2[%c0_11, %c0_12] : memref<128x128xbf16, #tpu.memory_space<vmem>>, vector<128x128xbf16>
    %cst_13 = arith.constant dense<0.000000e+00> : vector<16x128xf32>
    %33 = tpu.matmul %31, %32, %cst_13 {dimension_numbers = #tpu.dot_dimension_numbers<[1], [0], [0], [1], [0, 0, 1, 1], [], []>} : vector<16x128xbf16>, vector<128x128xbf16>, vector<16x128xf32> -> vector<16x128xf32>
    %34 = vector.broadcast %2 : vector<1x128xf32> to vector<16x128xf32>
    %35 = arith.addf %33, %34 : vector<16x128xf32>
    %36 = vector.shape_cast %35 : vector<16x128xf32> to vector<2x8x128xf32>
    %cst_14 = arith.constant dense<0.000000e+00> : vector<2x128xf32>
    %37 = vector.multi_reduction <add>, %36, %cst_14 [1] : vector<2x8x128xf32> to vector<2x128xf32>
    %38 = vector.shape_cast %37 : vector<2x128xf32> to vector<2x1x128xf32>
    %cst_15 = arith.constant 8.000000e+00 : f32
    %39 = vector.broadcast %cst_15 : f32 to vector<2x1x128xf32>
    %40 = arith.divf %38, %39 : vector<2x1x128xf32>
    %41 = arith.mulf %36, %36 : vector<2x8x128xf32>
    %cst_16 = arith.constant dense<0.000000e+00> : vector<2x128xf32>
    %42 = vector.multi_reduction <add>, %41, %cst_16 [1] : vector<2x8x128xf32> to vector<2x128xf32>
    %43 = vector.shape_cast %42 : vector<2x128xf32> to vector<2x1x128xf32>
    %cst_17 = arith.constant 8.000000e+00 : f32
    %44 = vector.broadcast %cst_17 : f32 to vector<2x1x128xf32>
    %45 = arith.divf %43, %44 : vector<2x1x128xf32>
    %46 = arith.mulf %40, %40 : vector<2x1x128xf32>
    %47 = arith.subf %45, %46 : vector<2x1x128xf32>
    %cst_18 = arith.constant 0.000000e+00 : f32
    %48 = vector.broadcast %cst_18 : f32 to vector<2x1x128xf32>
    %49 = arith.maximumf %47, %48 : vector<2x1x128xf32>
    %50 = vector.broadcast %40 : vector<2x1x128xf32> to vector<2x8x128xf32>
    %51 = arith.subf %36, %50 : vector<2x8x128xf32>
    %cst_19 = arith.constant 9.99999974E-6 : f32
    %52 = vector.broadcast %cst_19 : f32 to vector<2x1x128xf32>
    %53 = arith.addf %49, %52 : vector<2x1x128xf32>
    %54 = math.rsqrt %53 : vector<2x1x128xf32>
    %55 = vector.broadcast %54 : vector<2x1x128xf32> to vector<2x8x128xf32>
    %56 = arith.mulf %51, %55 : vector<2x8x128xf32>
    %57 = vector.shape_cast %3 : vector<1x128xf32> to vector<1x1x128xf32>
    %58 = vector.broadcast %57 : vector<1x1x128xf32> to vector<2x8x128xf32>
    %59 = arith.mulf %56, %58 : vector<2x8x128xf32>
    %60 = vector.shape_cast %4 : vector<1x128xf32> to vector<1x1x128xf32>
    %61 = vector.broadcast %60 : vector<1x1x128xf32> to vector<2x8x128xf32>
    %62 = arith.addf %59, %61 : vector<2x8x128xf32>
    %63 = vector.shape_cast %62 : vector<2x8x128xf32> to vector<16x128xf32>
    %cst_20 = arith.constant 0.000000e+00 : f32
    %64 = vector.broadcast %cst_20 : f32 to vector<16x128xf32>
    %65 = arith.maximumf %63, %64 : vector<16x128xf32>
    %66 = arith.truncf %65 : vector<16x128xf32> to vector<16x128xbf16>
    %c0_21 = arith.constant 0 : index
    %c0_22 = arith.constant 0 : index
    %67 = vector.load %arg3[%c0_21, %c0_22] : memref<128x128xbf16, #tpu.memory_space<vmem>>, vector<128x128xbf16>
    %cst_23 = arith.constant dense<0.000000e+00> : vector<16x128xf32>
    %68 = tpu.matmul %66, %67, %cst_23 {dimension_numbers = #tpu.dot_dimension_numbers<[1], [0], [0], [1], [0, 0, 1, 1], [], []>} : vector<16x128xbf16>, vector<128x128xbf16>, vector<16x128xf32> -> vector<16x128xf32>
    %69 = vector.broadcast %5 : vector<1x128xf32> to vector<16x128xf32>
    %70 = arith.addf %68, %69 : vector<16x128xf32>
    %71 = arith.mulf %70, %70 : vector<16x128xf32>
    %cst_24 = arith.constant dense<0.000000e+00> : vector<16xf32>
    %72 = vector.multi_reduction <add>, %71, %cst_24 [1] : vector<16x128xf32> to vector<16xf32>
    %73 = vector.shape_cast %72 : vector<16xf32> to vector<16x1xf32>
    %cst_25 = arith.constant 1.000000e-24 : f32
    %74 = vector.broadcast %cst_25 : f32 to vector<16x1xf32>
    %75 = arith.maximumf %73, %74 : vector<16x1xf32>
    %76 = math.rsqrt %75 : vector<16x1xf32>
    %77 = vector.broadcast %76 : vector<16x1xf32> to vector<16x128xf32>
    %78 = arith.mulf %70, %77 : vector<16x128xf32>
    %c0_26 = arith.constant 0 : index
    %c0_27 = arith.constant 0 : index
    %79 = vector.load %arg5[%c0_26, %c0_27] : memref<16x128xf32, #tpu.memory_space<vmem>>, vector<16x128xf32>
    tpu.vector_store %arg5[%c0_26, %c0_27], %78 {strides = array<i32>} : memref<16x128xf32, #tpu.memory_space<vmem>>, vector<16x128xf32>,
    return
  }
}

</mosaic_0001>

<llo_original>
// kernel: simclr_forward_pair.1
$region0: #{simclr_forward_pair.1}
  #allocation0 [shape = 'u32[]', space=smem, size = 0x4, offset = 0x4, fixed_abs, tag = 'smem constant byte address 0x4 - core index']
  #allocation1 [shape = 'u32[144,128]{1,0:T(1,128)}', space=vmem, size = 0x12000, scoped, tag = 'internal scratch']
  %s0 = inlined_call_operand.vmem [shape: bf16[16,256], index: 0, kind: input, shape index: {}]
  %s1 = inlined_call_operand.hbm [shape: bf16[256,128], index: 1, kind: input, shape index: {}]
  %s2 = inlined_call_operand.vmem [shape: bf16[128,128], index: 2, kind: input, shape index: {}]
  %s3 = inlined_call_operand.hbm [shape: bf16[128,128], index: 3, kind: input, shape index: {}]
  %s4 = inlined_call_operand.vmem [shape: f32[8,128], index: 4, kind: input, shape index: {}]
  %s5 = inlined_call_operand.vmem [shape: f32[16,128], index: 5, kind: output, shape index: {}]
  %s6 = sld [smem:[#allocation0]]
  $region38: #{simclr_forward_pair.1} parent=0
    _
  %s8 = ssub.s32 1, %s6
  %s9 = scalar_select 0, %s8, %s6
  $region1: #{simclr_forward_pair.1} parent=0
    #allocation2 [shape = 'u8[65536]{0}', space=vmem, size = 0x10000, scoped, tag = 'input window, operand 1, single buffered']
    #allocation3 [shape = 's32[1]{0}', space=sflag, size = 0x4, scoped, tag = 'scoped memory for simclr_forward_pair.1']
    #allocation4 [shape = 'u8[32768]{0}', space=vmem, size = 0x8000, scoped, tag = 'input window, operand 3, single buffered']
    #allocation5 [shape = 's32[1]{0}', space=sflag, size = 0x4, scoped, tag = 'scoped memory for simclr_forward_pair.1']
    %10 = vsyncpa [#allocation3], 0
    %11 = vsyncpa [#allocation5], 0
    // Predicated region
    $region2: #{simclr_forward_pair.1} parent=1 // pred_check
      _
    $region3: #{simclr_forward_pair.1} parent=1 // pred_check_branch
      %13 = sbr.rel (0) target = $region5
    $region4: #{simclr_forward_pair.1} parent=1 // pred_region
      _
    $region5: #{simclr_forward_pair.1} parent=1 // pred_fallthru
      _
    // Predicated region
    $region6: #{simclr_forward_pair.1} parent=1 // pred_check
      _
    $region7: #{simclr_forward_pair.1} parent=1 // pred_check_branch
      %15 = sbr.rel (0) target = $region9
    $region8: #{simclr_forward_pair.1} parent=1 // pred_region
      %s17 = ssub.s32 2048, 2048
      %18 = vsyncadd [#allocation3], %s17
      %s19 = sshll.u32 [#allocation2], 4
      %s20 = int_to_ptr.vmem [resolvable:$true] %s19
      %25 = dma.hbm_to_vmem [thread:$0]  %s1, 2048, %s20, [#allocation3], 64, 64, 4
    $region9: #{simclr_forward_pair.1} parent=1 // pred_fallthru
      _
    // Predicated region
    $region10: #{simclr_forward_pair.1} parent=1 // pred_check
      _
    $region11: #{simclr_forward_pair.1} parent=1 // pred_check_branch
      %27 = sbr.rel (0) target = $region13
    $region12: #{simclr_forward_pair.1} parent=1 // pred_region
      _
    $region13: #{simclr_forward_pair.1} parent=1 // pred_fallthru
      _
    // Predicated region
    $region14: #{simclr_forward_pair.1} parent=1 // pred_check
      _
    $region15: #{simclr_forward_pair.1} parent=1 // pred_check_branch
      %29 = sbr.rel (0) target = $region17
    $region16: #{simclr_forward_pair.1} parent=1 // pred_region
      %s31 = ssub.s32 1024, 1024
      %32 = vsyncadd [#allocation5], %s31
      %s33 = sshll.u32 [#allocation4], 4
      %s34 = int_to_ptr.vmem [resolvable:$true] %s33
      %39 = dma.hbm_to_vmem [thread:$0]  %s3, 1024, %s34, [#allocation5], 64, 64, 4
    $region17: #{simclr_forward_pair.1} parent=1 // pred_fallthru
      _
    // Predicated region
    $region18: #{simclr_forward_pair.1} parent=1 // pred_check
      _
    $region19: #{simclr_forward_pair.1} parent=1 // pred_check_branch
      %41 = sbr.rel (0) target = $region21
    $region20: #{simclr_forward_pair.1} parent=1 // pred_region
      _
    $region21: #{simclr_forward_pair.1} parent=1 // pred_fallthru
      _
    // Predicated region
    $region22: #{simclr_forward_pair.1} parent=1 // pred_check
      _
    $region23: #{simclr_forward_pair.1} parent=1 // pred_check_branch
      %43 = sbr.rel (0) target = $region25
    $region24: #{simclr_forward_pair.1} parent=1 // pred_region
      %44 = dma.done [#allocation3], 2048
    $region25: #{simclr_forward_pair.1} parent=1 // pred_fallthru
      _
    // Predicated region
    $region26: #{simclr_forward_pair.1} parent=1 // pred_check
      _
    $region27: #{simclr_forward_pair.1} parent=1 // pred_check_branch
      %46 = sbr.rel (0) target = $region29
    $region28: #{simclr_forward_pair.1} parent=1 // pred_region
      %47 = dma.done [#allocation5], 1024
    $region29: #{simclr_forward_pair.1} parent=1 // pred_fallthru
      _
    %v49 = vld [vmem:[%s4] sm:$0xff]
    %v50 = vld [vmem:[%s0] sm:$0xff]
    %v51 = vld [vmem:[%s0 + $0x8] sm:$0xff]
    %v52 = vld [vmem:[#allocation2] sm:$0xf]
    %v53 = vld [vmem:[#allocation2 + $0x4] sm:$0xf]
    %v54 = vld [vmem:[#allocation2 + $0x8] sm:$0xf]
    %v55 = vld [vmem:[#allocation2 + $0xc] sm:$0xf]
    %v56 = vld [vmem:[#allocation2 + $0x10] sm:$0xf]
    %v57 = vld [vmem:[#allocation2 + $0x14] sm:$0xf]
    %v58 = vld [vmem:[#allocation2 + $0x18] sm:$0xf]
    %v59 = vld [vmem:[#allocation2 + $0x1c] sm:$0xf]
    %v60 = vld [vmem:[#allocation2 + $0x20] sm:$0xf]
    %v61 = vld [vmem:[#allocation2 + $0x24] sm:$0xf]
    %v62 = vld [vmem:[#allocation2 + $0x28] sm:$0xf]
    %v63 = vld [vmem:[#allocation2 + $0x2c] sm:$0xf]
    %v64 = vld [vmem:[#allocation2 + $0x30] sm:$0xf]
    %v65 = vld [vmem:[#allocation2 + $0x34] sm:$0xf]
    %v66 = vld [vmem:[#allocation2 + $0x38] sm:$0xf]
    %v67 = vld [vmem:[#allocation2 + $0x3c] sm:$0xf]
    %v68 = vld [vmem:[#allocation2 + $0x40] sm:$0xf]
    %v69 = vld [vmem:[#allocation2 + $0x44] sm:$0xf]
    %v70 = vld [vmem:[#allocation2 + $0x48] sm:$0xf]
    %v71 = vld [vmem:[#allocation2 + $0x4c] sm:$0xf]
    %v72 = vld [vmem:[#allocation2 + $0x50] sm:$0xf]
    %v73 = vld [vmem:[#allocation2 + $0x54] sm:$0xf]
    %v74 = vld [vmem:[#allocation2 + $0x58] sm:$0xf]
    %v75 = vld [vmem:[#allocation2 + $0x5c] sm:$0xf]
    %v76 = vld [vmem:[#allocation2 + $0x60] sm:$0xf]
    %v77 = vld [vmem:[#allocation2 + $0x64] sm:$0xf]
    %v78 = vld [vmem:[#allocation2 + $0x68] sm:$0xf]
    %v79 = vld [vmem:[#allocation2 + $0x6c] sm:$0xf]
    %v80 = vld [vmem:[#allocation2 + $0x70] sm:$0xf]
    %v81 = vld [vmem:[#allocation2 + $0x74] sm:$0xf]
    %v82 = vld [vmem:[#allocation2 + $0x78] sm:$0xf]
    %v83 = vld [vmem:[#allocation2 + $0x7c] sm:$0xf]
    %v84 = vlaneseq
    %v85 = vshrl.u32 %v84, 7
    %v86 = vsub.s32 0, %v85
    %v87 = vrot.slane %v49, %v86
    %v90 = vunpack.c.l.b16 %v50
    %v91 = vunpack.c.h.b16 %v50
    %v92 = vunpack.c.l.b16 %v51
    %v93 = vunpack.c.h.b16 %v51
    %v94 = vpack.c.b16 %v92, %v90
    %v95 = vpack.c.b16 %v93, %v91
    %v130 = vunpack.c.l.b16 %v52
    %v131 = vunpack.c.l.b16 %v53
    %v132 = vunpack.c.l.b16 %v54
    %v133 = vunpack.c.l.b16 %v55
    %v134 = vunpack.c.l.b16 %v56
    %v135 = vunpack.c.l.b16 %v57
    %v136 = vunpack.c.l.b16 %v58
    %v137 = vunpack.c.l.b16 %v59
    %v138 = vunpack.c.l.b16 %v60
    %v139 = vunpack.c.l.b16 %v61
    %v140 = vunpack.c.l.b16 %v62
    %v141 = vunpack.c.l.b16 %v63
    %v142 = vunpack.c.l.b16 %v64
    %v143 = vunpack.c.l.b16 %v65
    %v144 = vunpack.c.l.b16 %v66
    %v145 = vunpack.c.l.b16 %v67
    %v146 = vunpack.c.l.b16 %v68
    %v147 = vunpack.c.l.b16 %v69
    %v148 = vunpack.c.l.b16 %v70
    %v149 = vunpack.c.l.b16 %v71
    %v150 = vunpack.c.l.b16 %v72
    %v151 = vunpack.c.l.b16 %v73
    %v152 = vunpack.c.l.b16 %v74
    %v153 = vunpack.c.l.b16 %v75
    %v154 = vunpack.c.l.b16 %v76
    %v155 = vunpack.c.l.b16 %v77
    %v156 = vunpack.c.l.b16 %v78
    %v157 = vunpack.c.l.b16 %v79
    %v158 = vunpack.c.l.b16 %v80
    %v159 = vunpack.c.l.b16 %v81
    %v160 = vunpack.c.l.b16 %v82
    %v161 = vunpack.c.l.b16 %v83
    %v162 = vpack.c.b16 %v131, %v130
    %v163 = vpack.c.b16 %v133, %v132
    %v164 = vpack.c.b16 %v135, %v134
    %v165 = vpack.c.b16 %v137, %v136
    %v166 = vpack.c.b16 %v139, %v138
    %v167 = vpack.c.b16 %v141, %v140
    %v168 = vpack.c.b16 %v143, %v142
    %v169 = vpack.c.b16 %v145, %v144
    %v170 = vpack.c.b16 %v147, %v146
    %v171 = vpack.c.b16 %v149, %v148
    %v172 = vpack.c.b16 %v151, %v150
    %v173 = vpack.c.b16 %v153, %v152
    %v174 = vpack.c.b16 %v155, %v154
    %v175 = vpack.c.b16 %v157, %v156
    %v176 = vpack.c.b16 %v159, %v158
    %v177 = vpack.c.b16 %v161, %v160
    %194 = vmatprep.subr.bf16.mxu0 0
    %195 = vmatpush1.bf16.msra.mxu0 %v169
    %196 = vmatprep.subr.bf16.mxu0 0
    %197 = vmatpush1.bf16.msra.mxu0 %v168
    %198 = vmatprep.subr.bf16.mxu0 0
    %199 = vmatpush1.bf16.msra.mxu0 %v167
    %200 = vmatprep.subr.bf16.mxu0 0
    %201 = vmatpush1.bf16.msra.mxu0 %v166
    %202 = vmatprep.subr.bf16.mxu0 0
    %203 = vmatpush1.bf16.msra.mxu0 %v165
    %204 = vmatprep.subr.bf16.mxu0 0
    %205 = vmatpush1.bf16.msra.mxu0 %v164
    %206 = vmatprep.subr.bf16.mxu0 0
    %207 = vmatpush1.bf16.msra.mxu0 %v163
    %208 = vmatprep.subr.bf16.mxu0 0
    %209 = vmatpush1.bf16.msra.mxu0 %v162
    %210 = vmatprep.subr.bf16.mxu0 0
    %211 = vmatpush2.bf16.msra.mxu0 %v177
    %212 = vmatprep.subr.bf16.mxu0 0
    %213 = vmatpush2.bf16.msra.mxu0 %v176
    %214 = vmatprep.subr.bf16.mxu0 0
    %215 = vmatpush2.bf16.msra.mxu0 %v175
    %216 = vmatprep.subr.bf16.mxu0 0
    %217 = vmatpush2.bf16.msra.mxu0 %v174
    %218 = vmatprep.subr.bf16.mxu0 0
    %219 = vmatpush2.bf16.msra.mxu0 %v173
    %220 = vmatprep.subr.bf16.mxu0 0
    %221 = vmatpush2.bf16.msra.mxu0 %v172
    %222 = vmatprep.subr.bf16.mxu0 0
    %223 = vmatpush2.bf16.msra.mxu0 %v171
    %224 = vmatprep.subr.bf16.mxu0 0
    %225 = vmatpush2.bf16.msra.mxu0 %v170
    %226 = vmatprep.mubr.bf16.mxu0 %v95
    %227 = vmatmul.mubr.bf16.gmra.mxu0 %v94
    %v228 = vpop.f32.mrf.mxu0
    %v229 = vadd.f32 %v87, %v228
    %v230 = vpop.f32.mrf.mxu0
    %v231 = vpop.f32.mrf.mxu0
    %v232 = vadd.f32 %v87, %v231
    %v233 = vpop.f32.mrf.mxu0
    %234 = vdwg.mxu0
    %235 = vadd.xlane.f32.xlu0 %v229
    %v236 = vpop.xlane.xlu0 %235
    %237 = vadd.xlane.f32.xlu0 %v232
    %v238 = vpop.xlane.xlu0 %237
    %v239 = vrcp.pop 128.0
    %v240 = vmul.f32 %v236, %v239
    %v241 = vmul.f32 %v238, %v239
    %v242 = vmul.f32 %v229, %v229
    %v243 = vmul.f32 %v232, %v232
    %244 = vadd.xlane.f32.xlu0 %v242
    %v245 = vpop.xlane.xlu0 %244
    %246 = vadd.xlane.f32.xlu0 %v243
    %v247 = vpop.xlane.xlu0 %246
    %v248 = vmul.f32 %v245, %v239
    %v249 = vmul.f32 %v247, %v239
    %v250 = vmul.f32 %v240, %v240
    %v251 = vmul.f32 %v241, %v241
    %v252 = vsub.f32 %v248, %v250
    %v253 = vsub.f32 %v249, %v251
    %v254 = vmax.f32 %v252, 0.0
    %v255 = vmax.f32 %v253, 0.0
    %v256 = vsub.f32 %v229, %v240
    %v257 = vsub.f32 %v232, %v241
    %v258 = vadd.f32 %v254, 1e-05
    %v259 = vadd.f32 %v255, 1e-05
    %v260 = vrsqrt.pop %v258
    %v261 = vrsqrt.pop %v259
    %v262 = vmul.f32 %v256, %v260
    %v263 = vmul.f32 %v257, %v261
    %v264 = vpack.c.bf16 %v263, %v262
    %v265 = vld [vmem:[%s2] sm:$0xf]
    %v266 = vld [vmem:[%s2 + $0x4] sm:$0xf]
    %v267 = vld [vmem:[%s2 + $0x8] sm:$0xf]
    %v268 = vld [vmem:[%s2 + $0xc] sm:$0xf]
    %v269 = vld [vmem:[%s2 + $0x10] sm:$0xf]
    %v270 = vld [vmem:[%s2 + $0x14] sm:$0xf]
    %v271 = vld [vmem:[%s2 + $0x18] sm:$0xf]
    %v272 = vld [vmem:[%s2 + $0x1c] sm:$0xf]
    %v273 = vld [vmem:[%s2 + $0x20] sm:$0xf]
    %v274 = vld [vmem:[%s2 + $0x24] sm:$0xf]
    %v275 = vld [vmem:[%s2 + $0x28] sm:$0xf]
    %v276 = vld [vmem:[%s2 + $0x2c] sm:$0xf]
    %v277 = vld [vmem:[%s2 + $0x30] sm:$0xf]
    %v278 = vld [vmem:[%s2 + $0x34] sm:$0xf]
    %v279 = vld [vmem:[%s2 + $0x38] sm:$0xf]
    %v280 = vld [vmem:[%s2 + $0x3c] sm:$0xf]
    %v281 = vlaneseq
    %v282 = vshrl.u32 %v281, 7
    %v283 = vsub.s32 1, %v282
    %v284 = vrot.slane %v49, %v283
    %v301 = vunpack.c.l.b16 %v265
    %v302 = vunpack.c.l.b16 %v266
    %v303 = vunpack.c.l.b16 %v267
    %v304 = vunpack.c.l.b16 %v268
    %v305 = vunpack.c.l.b16 %v269
    %v306 = vunpack.c.l.b16 %v270
    %v307 = vunpack.c.l.b16 %v271
    %v308 = vunpack.c.l.b16 %v272
    %v309 = vunpack.c.l.b16 %v273
    %v310 = vunpack.c.l.b16 %v274
    %v311 = vunpack.c.l.b16 %v275
    %v312 = vunpack.c.l.b16 %v276
    %v313 = vunpack.c.l.b16 %v277
    %v314 = vunpack.c.l.b16 %v278
    %v315 = vunpack.c.l.b16 %v279
    %v316 = vunpack.c.l.b16 %v280
    %v317 = vpack.c.b16 %v302, %v301
    %v318 = vpack.c.b16 %v304, %v303
    %v319 = vpack.c.b16 %v306, %v305
    %v320 = vpack.c.b16 %v308, %v307
    %v321 = vpack.c.b16 %v310, %v309
    %v322 = vpack.c.b16 %v312, %v311
    %v323 = vpack.c.b16 %v314, %v313
    %v324 = vpack.c.b16 %v316, %v315
    %333 = vmatprep.subr.bf16.mxu0 0
    %334 = vmatpush1.bf16.msra.mxu0 %v324
    %335 = vmatprep.subr.bf16.mxu0 0
    %336 = vmatpush1.bf16.msra.mxu0 %v323
    %337 = vmatprep.subr.bf16.mxu0 0
    %338 = vmatpush1.bf16.msra.mxu0 %v322
    %339 = vmatprep.subr.bf16.mxu0 0
    %340 = vmatpush1.bf16.msra.mxu0 %v321
    %341 = vmatprep.subr.bf16.mxu0 0
    %342 = vmatpush1.bf16.msra.mxu0 %v320
    %343 = vmatprep.subr.bf16.mxu0 0
    %344 = vmatpush1.bf16.msra.mxu0 %v319
    %345 = vmatprep.subr.bf16.mxu0 0
    %346 = vmatpush1.bf16.msra.mxu0 %v318
    %347 = vmatprep.subr.bf16.mxu0 0
    %348 = vmatpush1.bf16.msra.mxu0 %v317
    %349 = vmatprep.subr.bf16.mxu0 0
    %350 = vmatpush2.bf16.msra.mxu0 0
    %351 = vmatprep.subr.bf16.mxu0 0
    %352 = vmatpush2.bf16.msra.mxu0 0
    %353 = vmatprep.subr.bf16.mxu0 0
    %354 = vmatpush2.bf16.msra.mxu0 0
    %355 = vmatprep.subr.bf16.mxu0 0
    %356 = vmatpush2.bf16.msra.mxu0 0
    %357 = vmatprep.subr.bf16.mxu0 0
    %358 = vmatpush2.bf16.msra.mxu0 0
    %359 = vmatprep.subr.bf16.mxu0 0
    %360 = vmatpush2.bf16.msra.mxu0 0
    %361 = vmatprep.subr.bf16.mxu0 0
    %362 = vmatpush2.bf16.msra.mxu0 0
    %363 = vmatprep.subr.bf16.mxu0 0
    %364 = vmatpush2.bf16.msra.mxu0 0
    %365 = vmatprep.mubr.bf16.mxu0 0
    %366 = vmatmul.mubr.bf16.gmra.mxu0 %v264
    %v367 = vpop.f32.mrf.mxu0
    %v368 = vadd.f32 %v284, %v367
    %v369 = vpop.f32.mrf.mxu0
    %v370 = vpop.f32.mrf.mxu0
    %v371 = vadd.f32 %v284, %v370
    %v372 = vpop.f32.mrf.mxu0
    %373 = vdwg.mxu0
    %v374 = vrot.slane %v368, 4
    %v375 = vadd.f32 %v368, %v374
    %v376 = vrot.slane %v375, 2
    %v377 = vadd.f32 %v375, %v376
    %v378 = vrot.slane %v377, 1
    %v379 = vadd.f32 %v377, %v378
    %v380 = vrot.slane %v371, 4
    %v381 = vadd.f32 %v371, %v380
    %v382 = vrot.slane %v381, 2
    %v383 = vadd.f32 %v381, %v382
    %v384 = vrot.slane %v383, 1
    %v385 = vadd.f32 %v383, %v384
    %v386 = vrcp.pop 8.0
    %v387 = vmul.f32 %v379, %v386
    %v388 = vmul.f32 %v385, %v386
    %v389 = vmul.f32 %v368, %v368
    %v390 = vmul.f32 %v371, %v371
    %v391 = vrot.slane %v389, 4
    %v392 = vadd.f32 %v389, %v391
    %v393 = vrot.slane %v392, 2
    %v394 = vadd.f32 %v392, %v393
    %v395 = vrot.slane %v394, 1
    %v396 = vadd.f32 %v394, %v395
    %v397 = vrot.slane %v390, 4
    %v398 = vadd.f32 %v390, %v397
    %v399 = vrot.slane %v398, 2
    %v400 = vadd.f32 %v398, %v399
    %v401 = vrot.slane %v400, 1
    %v402 = vadd.f32 %v400, %v401
    %v403 = vmul.f32 %v396, %v386
    %v404 = vmul.f32 %v402, %v386
    %v405 = vmul.f32 %v387, %v387
    %v406 = vmul.f32 %v388, %v388
    %v407 = vsub.f32 %v403, %v405
    %v408 = vsub.f32 %v404, %v406
    %v409 = vmax.f32 %v407, 0.0
    %v410 = vmax.f32 %v408, 0.0
    %v411 = vsub.f32 %v368, %v387
    %v412 = vsub.f32 %v371, %v388
    %v413 = vadd.f32 %v409, 1e-05
    %v414 = vadd.f32 %v410, 1e-05
    %v415 = vrsqrt.pop %v413
    %v416 = vrsqrt.pop %v414
    %v417 = vmul.f32 %v411, %v415
    %v418 = vmul.f32 %v412, %v416
    %v419 = vlaneseq
    %v420 = vshrl.u32 %v419, 7
    %v421 = vsub.s32 2, %v420
    %v422 = vrot.slane %v49, %v421
    %v423 = vmul.f32 %v417, %v422
    %v424 = vmul.f32 %v418, %v422
    %v425 = vlaneseq
    %v426 = vshrl.u32 %v425, 7
    %v427 = vsub.s32 3, %v426
    %v428 = vrot.slane %v49, %v427
    %v429 = vadd.f32 %v423, %v428
    %v430 = vadd.f32 %v424, %v428
    %v431 = vmax.f32 %v429, 0.0
    %v432 = vmax.f32 %v430, 0.0
    %v433 = vpack.c.bf16 %v432, %v431
    %v434 = vld [vmem:[#allocation4] sm:$0xf]
    %v435 = vld [vmem:[#allocation4 + $0x4] sm:$0xf]
    %v436 = vld [vmem:[#allocation4 + $0x8] sm:$0xf]
    %v437 = vld [vmem:[#allocation4 + $0xc] sm:$0xf]
    %v438 = vld [vmem:[#allocation4 + $0x10] sm:$0xf]
    %v439 = vld [vmem:[#allocation4 + $0x14] sm:$0xf]
    %v440 = vld [vmem:[#allocation4 + $0x18] sm:$0xf]
    %v441 = vld [vmem:[#allocation4 + $0x1c] sm:$0xf]
    %v442 = vld [vmem:[#allocation4 + $0x20] sm:$0xf]
    %v443 = vld [vmem:[#allocation4 + $0x24] sm:$0xf]
    %v444 = vld [vmem:[#allocation4 + $0x28] sm:$0xf]
    %v445 = vld [vmem:[#allocation4 + $0x2c] sm:$0xf]
    %v446 = vld [vmem:[#allocation4 + $0x30] sm:$0xf]
    %v447 = vld [vmem:[#allocation4 + $0x34] sm:$0xf]
    %v448 = vld [vmem:[#allocation4 + $0x38] sm:$0xf]
    %v449 = vld [vmem:[#allocation4 + $0x3c] sm:$0xf]
    %v450 = vlaneseq
    %v451 = vshrl.u32 %v450, 7
    %v452 = vsub.s32 4, %v451
    %v453 = vrot.slane %v49, %v452
    %v470 = vunpack.c.l.b16 %v434
    %v471 = vunpack.c.l.b16 %v435
    %v472 = vunpack.c.l.b16 %v436
    %v473 = vunpack.c.l.b16 %v437
    %v474 = vunpack.c.l.b16 %v438
    %v475 = vunpack.c.l.b16 %v439
    %v476 = vunpack.c.l.b16 %v440
    %v477 = vunpack.c.l.b16 %v441
    %v478 = vunpack.c.l.b16 %v442
    %v479 = vunpack.c.l.b16 %v443
    %v480 = vunpack.c.l.b16 %v444
    %v481 = vunpack.c.l.b16 %v445
    %v482 = vunpack.c.l.b16 %v446
    %v483 = vunpack.c.l.b16 %v447
    %v484 = vunpack.c.l.b16 %v448
    %v485 = vunpack.c.l.b16 %v449
    %v486 = vpack.c.b16 %v471, %v470
    %v487 = vpack.c.b16 %v473, %v472
    %v488 = vpack.c.b16 %v475, %v474
    %v489 = vpack.c.b16 %v477, %v476
    %v490 = vpack.c.b16 %v479, %v478
    %v491 = vpack.c.b16 %v481, %v480
    %v492 = vpack.c.b16 %v483, %v482
    %v493 = vpack.c.b16 %v485, %v484
    %502 = vmatprep.subr.bf16.mxu0 0
    %503 = vmatpush1.bf16.msra.mxu0 %v493
    %504 = vmatprep.subr.bf16.mxu0 0
    %505 = vmatpush1.bf16.msra.mxu0 %v492
    %506 = vmatprep.subr.bf16.mxu0 0
    %507 = vmatpush1.bf16.msra.mxu0 %v491
    %508 = vmatprep.subr.bf16.mxu0 0
    %509 = vmatpush1.bf16.msra.mxu0 %v490
    %510 = vmatprep.subr.bf16.mxu0 0
    %511 = vmatpush1.bf16.msra.mxu0 %v489
    %512 = vmatprep.subr.bf16.mxu0 0
    %513 = vmatpush1.bf16.msra.mxu0 %v488
    %514 = vmatprep.subr.bf16.mxu0 0
    %515 = vmatpush1.bf16.msra.mxu0 %v487
    %516 = vmatprep.subr.bf16.mxu0 0
    %517 = vmatpush1.bf16.msra.mxu0 %v486
    %518 = vmatprep.subr.bf16.mxu0 0
    %519 = vmatpush2.bf16.msra.mxu0 0
    %520 = vmatprep.subr.bf16.mxu0 0
    %521 = vmatpush2.bf16.msra.mxu0 0
    %522 = vmatprep.subr.bf16.mxu0 0
    %523 = vmatpush2.bf16.msra.mxu0 0
    %524 = vmatprep.subr.bf16.mxu0 0
    %525 = vmatpush2.bf16.msra.mxu0 0
    %526 = vmatprep.subr.bf16.mxu0 0
    %527 = vmatpush2.bf16.msra.mxu0 0
    %528 = vmatprep.subr.bf16.mxu0 0
    %529 = vmatpush2.bf16.msra.mxu0 0
    %530 = vmatprep.subr.bf16.mxu0 0
    %531 = vmatpush2.bf16.msra.mxu0 0
    %532 = vmatprep.subr.bf16.mxu0 0
    %533 = vmatpush2.bf16.msra.mxu0 0
    %534 = vmatprep.mubr.bf16.mxu0 0
    %535 = vmatmul.mubr.bf16.gmra.mxu0 %v433
    %v536 = vpop.f32.mrf.mxu0
    %v537 = vadd.f32 %v453, %v536
    %v538 = vpop.f32.mrf.mxu0
    %v539 = vpop.f32.mrf.mxu0
    %v540 = vadd.f32 %v453, %v539
    %v541 = vpop.f32.mrf.mxu0
    %542 = vdwg.mxu0
    %v543 = vmul.f32 %v537, %v537
    %v544 = vmul.f32 %v540, %v540
    %545 = vadd.xlane.f32.xlu0 %v543
    %v546 = vpop.xlane.xlu0 %545
    %547 = vadd.xlane.f32.xlu0 %v544
    %v548 = vpop.xlane.xlu0 %547
    %v549 = vmax.f32 %v546, 1e-24
    %v550 = vmax.f32 %v548, 1e-24
    %v551 = vrsqrt.pop %v549
    %v552 = vrsqrt.pop %v550
    %v553 = vmul.f32 %v537, %v551
    %v554 = vmul.f32 %v540, %v552
    %555 = vst [vmem:[%s5] sm:$0xff] %v553
    %556 = vst [vmem:[%s5 + $0x8] sm:$0xff] %v554
    // Predicated region
    $region30: #{simclr_forward_pair.1} parent=1 // pred_check
      _
    $region31: #{simclr_forward_pair.1} parent=1 // pred_check_branch
      %558 = sbr.rel (0) target = $region33
    $region32: #{simclr_forward_pair.1} parent=1 // pred_region
      _
    $region33: #{simclr_forward_pair.1} parent=1 // pred_fallthru
      _
    // Predicated region
    $region34: #{simclr_forward_pair.1} parent=1 // pred_check
      _
    $region35: #{simclr_forward_pair.1} parent=1 // pred_check_branch
      %560 = sbr.rel (0) target = $region37
    $region36: #{simclr_forward_pair.1} parent=1 // pred_region
      _
    $region37: #{simclr_forward_pair.1} parent=1 // pred_fallthru
      _
    %561 = vsyncpa [#allocation3], 1
    %562 = vsyncpa [#allocation5], 1

</llo_original>
